<compile_context>
chip_gen: v6e
topology: v6e:2x2x1
jax: 0.10.0
libtpu: 0.0.40
codegen_flags: <defaults>
</compile_context>

<pallas_src>
import functools

import jax
import jax.numpy as jnp
from jax.experimental import pallas as pl
from jax.experimental.pallas import tpu as pltpu

_LANES = 128
_ROW_ALIGN = 16  # keeps (rows, 128) blocks legal for f32 (8,128) and bf16 (16,128)


def _round_up(x, m):
    return ((x + m - 1) // m) * m


def _diou_elementwise(pred_ref, tgt_ref, eps, approx_recip):
    """Per-box DIoU loss for one (4, rows, 128) coordinate-major tile -> (rows,128) f32."""
    px1 = pred_ref[0].astype(jnp.float32)
    py1 = pred_ref[1].astype(jnp.float32)
    px2 = pred_ref[2].astype(jnp.float32)
    py2 = pred_ref[3].astype(jnp.float32)
    tx1 = tgt_ref[0].astype(jnp.float32)
    ty1 = tgt_ref[1].astype(jnp.float32)
    tx2 = tgt_ref[2].astype(jnp.float32)
    ty2 = tgt_ref[3].astype(jnp.float32)

    # intersection
    w = jnp.maximum(jnp.minimum(px2, tx2) - jnp.maximum(px1, tx1), 0.0)
    h = jnp.maximum(jnp.minimum(py2, ty2) - jnp.maximum(py1, ty1), 0.0)
    overlap = w * h

    # areas / union
    ap = (px2 - px1) * (py2 - py1)
    ag = (tx2 - tx1) * (ty2 - ty1)
    union = ap + ag - overlap + eps

    # enclosing box diagonal
    cw = jnp.maximum(jnp.maximum(px2, tx2) - jnp.minimum(px1, tx1), 0.0)
    ch = jnp.maximum(jnp.maximum(py2, ty2) - jnp.minimum(py1, ty1), 0.0)
    c2 = cw * cw + ch * ch + eps

    # squared center distance
    left = (tx1 + tx2 - (px1 + px2)) ** 2 * 0.25
    right = (ty1 + ty2 - (py1 + py2)) ** 2 * 0.25
    rho2 = left + right

    if approx_recip:
        inv_union = pl.reciprocal(union, approx=True)   # EUP slot (free vs VALU)
        inv_c2 = pl.reciprocal(c2, approx=True)
    else:
        inv_union = 1.0 / union
        inv_c2 = 1.0 / c2

    # loss = 1 - (iou - rho2/c2)
    return 1.0 - overlap * inv_union + rho2 * inv_c2


def _diou_none_kernel(pred_ref, tgt_ref, loss_ref, *, eps, loss_weight, approx_recip):
    loss = _diou_elementwise(pred_ref, tgt_ref, eps, approx_recip)
    if loss_weight != 1.0:
        loss = loss * loss_weight
    loss_ref[...] = loss.astype(loss_ref.dtype)


def _diou_psum_kernel(pred_ref, tgt_ref, psum_ref, *, eps, approx_recip,
                      n_valid, rows_per_tile, grid):
    loss = _diou_elementwise(pred_ref, tgt_ref, eps, approx_recip)

    def store(x):
        # cheap sublane reduce to a per-lane partial sum; final reduce in XLA
        psum_ref[...] = jnp.sum(x, axis=0, keepdims=True).reshape(1, 1, _LANES)

    npad = grid * rows_per_tile * _LANES
    if npad == n_valid:
        # no padding anywhere -> never pay for the mask
        store(loss)
    else:
        last = grid - 1

        @pl.when(pl.program_id(0) != last)
        def _():
            store(loss)

        @pl.when(pl.program_id(0) == last)
        def _():
            row = jax.lax.broadcasted_iota(jnp.int32, loss.shape, 0)
            lane = jax.lax.broadcasted_iota(jnp.int32, loss.shape, 1)
            idx = (last * rows_per_tile + row) * _LANES + lane
            store(jnp.where(idx < n_valid, loss, 0.0))


def diou_loss_tpu(pred, target, eps=1e-6, reduction="mean", loss_weight=1.0,
                  rows_per_tile=1024, approx_recip=True):
    """Equivalent of DIoULoss(eps, reduction, loss_weight)(pred, target).

    pred, target: (N, 4) arrays of boxes [x1, y1, x2, y2] (any float dtype).
    rows_per_tile: rows of 128 boxes per grid step (rounded to a multiple of 16).
    approx_recip: use the EUP approximate reciprocal (default; ~1e-3 rel drift).
    """
    assert pred.shape == target.shape and pred.ndim == 2 and pred.shape[-1] == 4
    assert reduction in ("none", "mean", "sum")
    n = pred.shape[0]

    rows = max(1, pl.cdiv(n, _LANES))
    rpt_max = max(_ROW_ALIGN, _round_up(int(rows_per_tile), _ROW_ALIGN))
    g = pl.cdiv(rows, rpt_max)
    # Prefer >= 2 grid steps so the "parallel" axis can shard across v7x's two
    # TensorCores (no-op for tiny inputs or single-TC chips).
    if g < 2 and rows > _ROW_ALIGN:
        g = 2
    rpt = max(_ROW_ALIGN, _round_up(pl.cdiv(rows, g), _ROW_ALIGN))
    rows_pad = _round_up(rows, rpt)
    grid = rows_pad // rpt
    npad = rows_pad * _LANES

    # coordinate-major, lane-dense layout; keep native dtype (cast happens in-kernel,
    # so HBM input traffic is not inflated by a wrapper pre-cast).
    pred_cm = jnp.pad(pred.T, ((0, 0), (0, npad - n))).reshape(4, rows_pad, _LANES)
    tgt_cm = jnp.pad(target.T, ((0, 0), (0, npad - n))).reshape(4, rows_pad, _LANES)

    in_specs = [
        pl.BlockSpec((4, rpt, _LANES), lambda i: (0, i, 0)),
        pl.BlockSpec((4, rpt, _LANES), lambda i: (0, i, 0)),
    ]
    cparams = pltpu.CompilerParams(dimension_semantics=("parallel",))

    if reduction == "none":
        out_dtype = pred.dtype if jnp.issubdtype(pred.dtype, jnp.floating) else jnp.float32
        kernel = functools.partial(_diou_none_kernel, eps=float(eps),
                                   loss_weight=float(loss_weight),
                                   approx_recip=approx_recip)
        loss = pl.pallas_call(
            kernel,
            out_shape=jax.ShapeDtypeStruct((rows_pad, _LANES), out_dtype),
            grid=(grid,),
            in_specs=in_specs,
            out_specs=pl.BlockSpec((rpt, _LANES), lambda i: (i, 0)),
            compiler_params=cparams,
        )(pred_cm, tgt_cm)
        return loss.reshape(-1)[:n]

    kernel = functools.partial(_diou_psum_kernel, eps=float(eps),
                               approx_recip=approx_recip,
                               n_valid=n, rows_per_tile=rpt, grid=grid)
    psums = pl.pallas_call(
        kernel,
        out_shape=jax.ShapeDtypeStruct((grid, 1, _LANES), jnp.float32),
        grid=(grid,),
        in_specs=in_specs,
        out_specs=pl.BlockSpec((1, 1, _LANES), lambda i: (i, 0, 0)),
        compiler_params=cparams,
    )(pred_cm, tgt_cm)
    total = jnp.sum(psums)
    if reduction == "sum":
        return loss_weight * total
    # 'mean': matches torch loss.mean() (NaN for an empty box set).
    return loss_weight * total / n


def _diou_ref(pred, target, eps=1e-6):
    """Pure-JAX reference of the PyTorch diou_loss (per-element, no reduction)."""
    p = pred.astype(jnp.float32)
    t = target.astype(jnp.float32)
    lt = jnp.maximum(p[:, :2], t[:, :2])
    rb = jnp.minimum(p[:, 2:], t[:, 2:])
    wh = jnp.maximum(rb - lt, 0.0)
    overlap = wh[:, 0] * wh[:, 1]
    ap = (p[:, 2] - p[:, 0]) * (p[:, 3] - p[:, 1])
    ag = (t[:, 2] - t[:, 0]) * (t[:, 3] - t[:, 1])
    union = ap + ag - overlap + eps
    ious = overlap / union
    e1 = jnp.minimum(p[:, :2], t[:, :2])
    e2 = jnp.maximum(p[:, 2:], t[:, 2:])
    ewh = jnp.maximum(e2 - e1, 0.0)
    c2 = ewh[:, 0] ** 2 + ewh[:, 1] ** 2 + eps
    left = (t[:, 0] + t[:, 2] - (p[:, 0] + p[:, 2])) ** 2 / 4
    right = (t[:, 1] + t[:, 3] - (p[:, 1] + p[:, 3])) ** 2 / 4
    rho2 = left + right
    return 1.0 - (ious - rho2 / c2)


if __name__ == "__main__":
    key = jax.random.PRNGKey(0)
    k1, k2, k3, k4 = jax.random.split(key, 4)

    # small case: 8 boxes, reduction='mean' (default DIoULoss config)
    N = 8
    p_xy = jax.random.uniform(k1, (N, 2), jnp.float32) * 8.0
    p_wh = jax.random.uniform(k2, (N, 2), jnp.float32) * 4.0 + 0.5
    pred = jnp.concatenate([p_xy, p_xy + p_wh], axis=1)          # (N, 4)

    t_xy = jax.random.uniform(k3, (N, 2), jnp.float32) * 8.0
    t_wh = jax.random.uniform(k4, (N, 2), jnp.float32) * 4.0 + 0.5
    target = jnp.concatenate([t_xy, t_xy + t_wh], axis=1)        # (N, 4)

    ref_none = _diou_ref(pred, target, eps=1e-6)
    ref_mean = jnp.mean(ref_none)

    # exact-divide path: tight tolerance
    loss_mean_exact = jax.block_until_ready(
        diou_loss_tpu(pred, target, eps=1e-6, reduction="mean", approx_recip=False))
    assert jnp.allclose(loss_mean_exact, ref_mean, atol=1e-5, rtol=1e-5), (
        loss_mean_exact, ref_mean)

    loss_none_exact = jax.block_until_ready(
        diou_loss_tpu(pred, target, eps=1e-6, reduction="none", approx_recip=False))
    assert jnp.allclose(loss_none_exact, ref_none, atol=1e-5, rtol=1e-5), (
        loss_none_exact, ref_none)

    # default approx-reciprocal path: loose tolerance
    loss_mean = jax.block_until_ready(
        diou_loss_tpu(pred, target, eps=1e-6, reduction="mean", loss_weight=1.0))
    assert jnp.allclose(loss_mean, ref_mean, atol=1e-2, rtol=1e-2), (loss_mean, ref_mean)

    loss_none = jax.block_until_ready(
        diou_loss_tpu(pred, target, eps=1e-6, reduction="none"))
    assert jnp.allclose(loss_none, ref_none, atol=1e-2, rtol=1e-2), (loss_none, ref_none)

    # multi-tile path (grid > 1) with a small rows_per_tile to exercise tiling +
    # last-tile-only masking
    N2 = 3000
    kk = jax.random.split(jax.random.PRNGKey(1), 4)
    p2_xy = jax.random.uniform(kk[0], (N2, 2), jnp.float32) * 16.0
    p2_wh = jax.random.uniform(kk[1], (N2, 2), jnp.float32) * 6.0 + 0.5
    pred2 = jnp.concatenate([p2_xy, p2_xy + p2_wh], axis=1)
    t2_xy = jax.random.uniform(kk[2], (N2, 2), jnp.float32) * 16.0
    t2_wh = jax.random.uniform(kk[3], (N2, 2), jnp.float32) * 6.0 + 0.5
    target2 = jnp.concatenate([t2_xy, t2_xy + t2_wh], axis=1)

    ref_sum = jnp.sum(_diou_ref(pred2, target2, eps=1e-6))

    loss_sum_exact = jax.block_until_ready(
        diou_loss_tpu(pred2, target2, eps=1e-6, reduction="sum",
                      rows_per_tile=16, approx_recip=False))
    assert jnp.allclose(loss_sum_exact, ref_sum, atol=1e-2, rtol=1e-5), (
        loss_sum_exact, ref_sum)

    loss_sum = jax.block_until_ready(
        diou_loss_tpu(pred2, target2, eps=1e-6, reduction="sum", rows_per_tile=16))
    assert jnp.allclose(loss_sum, ref_sum, rtol=5e-3), (loss_sum, ref_sum)

    # bf16 inputs: 'none' output is emitted in bf16 (half the writeback)
    pred_bf = pred2.astype(jnp.bfloat16)
    target_bf = target2.astype(jnp.bfloat16)
    loss_bf = jax.block_until_ready(
        diou_loss_tpu(pred_bf, target_bf, eps=1e-6, reduction="none", rows_per_tile=16))
    assert loss_bf.dtype == jnp.bfloat16 and loss_bf.shape == (N2,)
    ref_bf = _diou_ref(pred_bf, target_bf, eps=1e-6)
    assert jnp.allclose(loss_bf.astype(jnp.float32), ref_bf, atol=0.06, rtol=0.06)

    print("KERNEL_OK")
</pallas_src>

<mosaic_0001>
module attributes {stable_mosaic.version = 11 : i64} {
  func.func @_diou_psum_kernel(%arg0: i32, %arg1: memref<4x16x128xf32, #tpu.memory_space<vmem>>, %arg2: memref<4x16x128xf32, #tpu.memory_space<vmem>>, %arg3: memref<1x1x128xf32, #tpu.memory_space<vmem>>) attributes {dimension_semantics = [#tpu.dimension_semantics<parallel>], iteration_bounds = array<i64: 1>, scalar_prefetch = 0 : i64, scratch_operands = 0 : i64, tpu.core_type = #tpu.core_type<tc>, window_params = [{transform_indices = @transform_0, window_bounds = array<i64: 4, 16, 128>}, {transform_indices = @transform_1, window_bounds = array<i64: 4, 16, 128>}, {transform_indices = @transform_2, window_bounds = array<i64: 1, 1, 128>}]} {
    %c0 = arith.constant 0 : index
    %c0_0 = arith.constant 0 : index
    %c0_1 = arith.constant 0 : index
    %0 = vector.load %arg1[%c0, %c0_0, %c0_1] : memref<4x16x128xf32, #tpu.memory_space<vmem>>, vector<1x16x128xf32>
    %1 = vector.shape_cast %0 : vector<1x16x128xf32> to vector<16x128xf32>
    %c1 = arith.constant 1 : index
    %c0_2 = arith.constant 0 : index
    %c0_3 = arith.constant 0 : index
    %2 = vector.load %arg1[%c1, %c0_2, %c0_3] : memref<4x16x128xf32, #tpu.memory_space<vmem>>, vector<1x16x128xf32>
    %3 = vector.shape_cast %2 : vector<1x16x128xf32> to vector<16x128xf32>
    %c2 = arith.constant 2 : index
    %c0_4 = arith.constant 0 : index
    %c0_5 = arith.constant 0 : index
    %4 = vector.load %arg1[%c2, %c0_4, %c0_5] : memref<4x16x128xf32, #tpu.memory_space<vmem>>, vector<1x16x128xf32>
    %5 = vector.shape_cast %4 : vector<1x16x128xf32> to vector<16x128xf32>
    %c3 = arith.constant 3 : index
    %c0_6 = arith.constant 0 : index
    %c0_7 = arith.constant 0 : index
    %6 = vector.load %arg1[%c3, %c0_6, %c0_7] : memref<4x16x128xf32, #tpu.memory_space<vmem>>, vector<1x16x128xf32>
    %7 = vector.shape_cast %6 : vector<1x16x128xf32> to vector<16x128xf32>
    %c0_8 = arith.constant 0 : index
    %c0_9 = arith.constant 0 : index
    %c0_10 = arith.constant 0 : index
    %8 = vector.load %arg2[%c0_8, %c0_9, %c0_10] : memref<4x16x128xf32, #tpu.memory_space<vmem>>, vector<1x16x128xf32>
    %9 = vector.shape_cast %8 : vector<1x16x128xf32> to vector<16x128xf32>
    %c1_11 = arith.constant 1 : index
    %c0_12 = arith.constant 0 : index
    %c0_13 = arith.constant 0 : index
    %10 = vector.load %arg2[%c1_11, %c0_12, %c0_13] : memref<4x16x128xf32, #tpu.memory_space<vmem>>, vector<1x16x128xf32>
    %11 = vector.shape_cast %10 : vector<1x16x128xf32> to vector<16x128xf32>
    %c2_14 = arith.constant 2 : index
    %c0_15 = arith.constant 0 : index
    %c0_16 = arith.constant 0 : index
    %12 = vector.load %arg2[%c2_14, %c0_15, %c0_16] : memref<4x16x128xf32, #tpu.memory_space<vmem>>, vector<1x16x128xf32>
    %13 = vector.shape_cast %12 : vector<1x16x128xf32> to vector<16x128xf32>
    %c3_17 = arith.constant 3 : index
    %c0_18 = arith.constant 0 : index
    %c0_19 = arith.constant 0 : index
    %14 = vector.load %arg2[%c3_17, %c0_18, %c0_19] : memref<4x16x128xf32, #tpu.memory_space<vmem>>, vector<1x16x128xf32>
    %15 = vector.shape_cast %14 : vector<1x16x128xf32> to vector<16x128xf32>
    %16 = arith.minimumf %5, %13 : vector<16x128xf32>
    %17 = arith.maximumf %1, %9 : vector<16x128xf32>
    %18 = arith.subf %16, %17 : vector<16x128xf32>
    %cst = arith.constant 0.000000e+00 : f32
    %19 = vector.broadcast %cst : f32 to vector<16x128xf32>
    %20 = arith.maximumf %18, %19 : vector<16x128xf32>
    %21 = arith.minimumf %7, %15 : vector<16x128xf32>
    %22 = arith.maximumf %3, %11 : vector<16x128xf32>
    %23 = arith.subf %21, %22 : vector<16x128xf32>
    %cst_20 = arith.constant 0.000000e+00 : f32
    %24 = vector.broadcast %cst_20 : f32 to vector<16x128xf32>
    %25 = arith.maximumf %23, %24 : vector<16x128xf32>
    %26 = arith.mulf %20, %25 : vector<16x128xf32>
    %27 = arith.subf %5, %1 : vector<16x128xf32>
    %28 = arith.subf %7, %3 : vector<16x128xf32>
    %29 = arith.mulf %27, %28 : vector<16x128xf32>
    %30 = arith.subf %13, %9 : vector<16x128xf32>
    %31 = arith.subf %15, %11 : vector<16x128xf32>
    %32 = arith.mulf %30, %31 : vector<16x128xf32>
    %33 = arith.addf %29, %32 : vector<16x128xf32>
    %34 = arith.subf %33, %26 : vector<16x128xf32>
    %cst_21 = arith.constant 9.99999997E-7 : f32
    %35 = vector.broadcast %cst_21 : f32 to vector<16x128xf32>
    %36 = arith.addf %34, %35 : vector<16x128xf32>
    %37 = arith.maximumf %5, %13 : vector<16x128xf32>
    %38 = arith.minimumf %1, %9 : vector<16x128xf32>
    %39 = arith.subf %37, %38 : vector<16x128xf32>
    %cst_22 = arith.constant 0.000000e+00 : f32
    %40 = vector.broadcast %cst_22 : f32 to vector<16x128xf32>
    %41 = arith.maximumf %39, %40 : vector<16x128xf32>
    %42 = arith.maximumf %7, %15 : vector<16x128xf32>
    %43 = arith.minimumf %3, %11 : vector<16x128xf32>
    %44 = arith.subf %42, %43 : vector<16x128xf32>
    %cst_23 = arith.constant 0.000000e+00 : f32
    %45 = vector.broadcast %cst_23 : f32 to vector<16x128xf32>
    %46 = arith.maximumf %44, %45 : vector<16x128xf32>
    %47 = arith.mulf %41, %41 : vector<16x128xf32>
    %48 = arith.mulf %46, %46 : vector<16x128xf32>
    %49 = arith.addf %47, %48 : vector<16x128xf32>
    %cst_24 = arith.constant 9.99999997E-7 : f32
    %50 = vector.broadcast %cst_24 : f32 to vector<16x128xf32>
    %51 = arith.addf %49, %50 : vector<16x128xf32>
    %52 = arith.addf %9, %13 : vector<16x128xf32>
    %53 = arith.addf %1, %5 : vector<16x128xf32>
    %54 = arith.subf %52, %53 : vector<16x128xf32>
    %55 = arith.mulf %54, %54 : vector<16x128xf32>
    %cst_25 = arith.constant 2.500000e-01 : f32
    %56 = vector.broadcast %cst_25 : f32 to vector<16x128xf32>
    %57 = arith.mulf %55, %56 : vector<16x128xf32>
    %58 = arith.addf %11, %15 : vector<16x128xf32>
    %59 = arith.addf %3, %7 : vector<16x128xf32>
    %60 = arith.subf %58, %59 : vector<16x128xf32>
    %61 = arith.mulf %60, %60 : vector<16x128xf32>
    %cst_26 = arith.constant 2.500000e-01 : f32
    %62 = vector.broadcast %cst_26 : f32 to vector<16x128xf32>
    %63 = arith.mulf %61, %62 : vector<16x128xf32>
    %64 = arith.addf %57, %63 : vector<16x128xf32>
    %cst_27 = arith.constant 1.000000e+00 : f32
    %65 = vector.broadcast %cst_27 : f32 to vector<16x128xf32>
    %66 = arith.divf %65, %36 : vector<16x128xf32>
    %cst_28 = arith.constant 1.000000e+00 : f32
    %67 = vector.broadcast %cst_28 : f32 to vector<16x128xf32>
    %68 = arith.divf %67, %51 : vector<16x128xf32>
    %69 = arith.mulf %26, %66 : vector<16x128xf32>
    %cst_29 = arith.constant 1.000000e+00 : f32
    %70 = vector.broadcast %cst_29 : f32 to vector<16x128xf32>
    %71 = arith.subf %70, %69 : vector<16x128xf32>
    %72 = arith.mulf %64, %68 : vector<16x128xf32>
    %73 = arith.addf %71, %72 : vector<16x128xf32>
    %c0_i32 = arith.constant 0 : i32
    %74 = arith.cmpi ne, %arg0, %c0_i32 : i32
    %75 = arith.extui %74 : i1 to i32
    %c0_i32_30 = arith.constant 0 : i32
    %76 = arith.cmpi ne, %75, %c0_i32_30 : i32
    scf.if %76 {
      %cst_33 = arith.constant dense<0.000000e+00> : vector<128xf32>
      %80 = vector.multi_reduction <add>, %73, %cst_33 [0] : vector<16x128xf32> to vector<128xf32>
      %81 = vector.shape_cast %80 : vector<128xf32> to vector<1x128xf32>
      %82 = vector.shape_cast %81 : vector<1x128xf32> to vector<1x1x128xf32>
      %c0_34 = arith.constant 0 : index
      %c0_35 = arith.constant 0 : index
      %c0_36 = arith.constant 0 : index
      %83 = vector.load %arg3[%c0_34, %c0_35, %c0_36] : memref<1x1x128xf32, #tpu.memory_space<vmem>>, vector<1x1x128xf32>
      tpu.vector_store %arg3[%c0_34, %c0_35, %c0_36], %82 {strides = array<i32>} : memref<1x1x128xf32, #tpu.memory_space<vmem>>, vector<1x1x128xf32>,
    } else {
    }
    %c0_i32_31 = arith.constant 0 : i32
    %77 = arith.cmpi eq, %arg0, %c0_i32_31 : i32
    %78 = arith.extui %77 : i1 to i32
    %c0_i32_32 = arith.constant 0 : i32
    %79 = arith.cmpi ne, %78, %c0_i32_32 : i32
    scf.if %79 {
      %80 = tpu.iota {dimensions = array<i32: 0>} : vector<16x128xi32>
      %81 = tpu.iota {dimensions = array<i32: 1>} : vector<16x128xi32>
      %c0_i32_33 = arith.constant 0 : i32
      %82 = vector.broadcast %c0_i32_33 : i32 to vector<16x128xi32>
      %83 = arith.addi %82, %80 : vector<16x128xi32>
      %c128_i32 = arith.constant 128 : i32
      %84 = vector.broadcast %c128_i32 : i32 to vector<16x128xi32>
      %85 = arith.muli %83, %84 : vector<16x128xi32>
      %86 = arith.addi %85, %81 : vector<16x128xi32>
      %c8_i32 = arith.constant 8 : i32
      %87 = vector.broadcast %c8_i32 : i32 to vector<16x128xi32>
      %88 = arith.cmpi slt, %86, %87 : vector<16x128xi32>
      %cst_34 = arith.constant 0.000000e+00 : f32
      %89 = vector.broadcast %cst_34 : f32 to vector<16x128xf32>
      %90 = arith.select %88, %73, %89 : vector<16x128xi1>, vector<16x128xf32>
      %cst_35 = arith.constant dense<0.000000e+00> : vector<128xf32>
      %91 = vector.multi_reduction <add>, %90, %cst_35 [0] : vector<16x128xf32> to vector<128xf32>
      %92 = vector.shape_cast %91 : vector<128xf32> to vector<1x128xf32>
      %93 = vector.shape_cast %92 : vector<1x128xf32> to vector<1x1x128xf32>
      %c0_36 = arith.constant 0 : index
      %c0_37 = arith.constant 0 : index
      %c0_38 = arith.constant 0 : index
      %94 = vector.load %arg3[%c0_36, %c0_37, %c0_38] : memref<1x1x128xf32, #tpu.memory_space<vmem>>, vector<1x1x128xf32>
      tpu.vector_store %arg3[%c0_36, %c0_37, %c0_38], %93 {strides = array<i32>} : memref<1x1x128xf32, #tpu.memory_space<vmem>>, vector<1x1x128xf32>,
    } else {
    }
    return
  }
  func.func @transform_0(%arg0: i32) -> (i32, i32, i32) {
    %c0_i32 = arith.constant 0 : i32
    %c0_i32_0 = arith.constant 0 : i32
    %c0_i32_1 = arith.constant 0 : i32
    return %c0_i32, %arg0, %c0_i32_0 : i32, i32, i32
  }
  func.func @transform_1(%arg0: i32) -> (i32, i32, i32) {
    %c0_i32 = arith.constant 0 : i32
    %c0_i32_0 = arith.constant 0 : i32
    %c0_i32_1 = arith.constant 0 : i32
    return %c0_i32, %arg0, %c0_i32_0 : i32, i32, i32
  }
  func.func @transform_2(%arg0: i32) -> (i32, i32, i32) {
    %c0_i32 = arith.constant 0 : i32
    %c0_i32_0 = arith.constant 0 : i32
    %c0_i32_1 = arith.constant 0 : i32
    return %arg0, %c0_i32, %c0_i32_0 : i32, i32, i32
  }
}

</mosaic_0001>

<llo_original>
// kernel: tpu_custom_call.1
$region0: #{tpu_custom_call.1}
  #allocation0 [shape = 'u32[]', space=smem, size = 0x4, offset = 0x4, fixed_abs, tag = 'smem constant byte address 0x4 - core index']
  #allocation1 [shape = 'u32[144,128]{1,0:T(1,128)}', space=vmem, size = 0x12000, scoped, tag = 'internal scratch']
  %s0 = inlined_call_operand.hbm [shape: f32[4,16,128], index: 0, kind: input, shape index: {}]
  %s1 = inlined_call_operand.hbm [shape: f32[4,16,128], index: 1, kind: input, shape index: {}]
  %s2 = inlined_call_operand.hbm [shape: f32[1,1,128], index: 2, kind: output, shape index: {}]
  %s3 = sld [smem:[#allocation0]]
  $region34: #{tpu_custom_call.1} parent=0
    _
  %s5 = ssub.s32 1, %s3
  %s6 = scalar_select 0, %s5, %s3
  $region1: #{tpu_custom_call.1} parent=0
    #allocation2 [shape = 'u8[32768]{0}', space=vmem, size = 0x8000, scoped, tag = 'input window, operand 0, single buffered']
    #allocation3 [shape = 's32[1]{0}', space=sflag, size = 0x4, scoped, tag = 'scoped memory for tpu_custom_call.1']
    #allocation4 [shape = 's32[1]{0}', space=sflag, size = 0x4, scoped, tag = 'scoped memory for tpu_custom_call.1']
    #allocation5 [shape = 'u8[32768]{0}', space=vmem, size = 0x8000, scoped, tag = 'input window, operand 1, single buffered']
    #allocation6 [shape = 's32[1]{0}', space=sflag, size = 0x4, scoped, tag = 'scoped memory for tpu_custom_call.1']
    #allocation7 [shape = 'u8[512]{0}', space=vmem, size = 0x400, scoped, tag = 'output window, operand 0, single buffered']
    %7 = vsyncpa [#allocation3], 0
    %8 = vsyncpa [#allocation6], 0
    %9 = vsyncpa [#allocation4], 0
    // Predicated region
    $region2: #{tpu_custom_call.1} parent=1 // pred_check
      _
    $region3: #{tpu_custom_call.1} parent=1 // pred_check_branch
      %11 = sbr.rel (0) target = $region5
    $region4: #{tpu_custom_call.1} parent=1 // pred_region
      %s13 = ssub.s32 1024, 1024
      %14 = vsyncadd [#allocation3], %s13
      %s15 = sshll.u32 [#allocation2], 4
      %s16 = int_to_ptr.vmem [resolvable:$true] %s15
      %21 = dma.hbm_to_vmem [thread:$0]  %s0, 1024, %s16, [#allocation3], 128, 128, 8
    $region5: #{tpu_custom_call.1} parent=1 // pred_fallthru
      _
    // Predicated region
    $region6: #{tpu_custom_call.1} parent=1 // pred_check
      _
    $region7: #{tpu_custom_call.1} parent=1 // pred_check_branch
      %23 = sbr.rel (0) target = $region9
    $region8: #{tpu_custom_call.1} parent=1 // pred_region
      %s25 = ssub.s32 1024, 1024
      %26 = vsyncadd [#allocation6], %s25
      %s27 = sshll.u32 [#allocation5], 4
      %s28 = int_to_ptr.vmem [resolvable:$true] %s27
      %33 = dma.hbm_to_vmem [thread:$0]  %s1, 1024, %s28, [#allocation6], 128, 128, 8
    $region9: #{tpu_custom_call.1} parent=1 // pred_fallthru
      _
    // Predicated region
    $region10: #{tpu_custom_call.1} parent=1 // pred_check
      _
    $region11: #{tpu_custom_call.1} parent=1 // pred_check_branch
      %35 = sbr.rel (0) target = $region13
    $region12: #{tpu_custom_call.1} parent=1 // pred_region
      %36 = dma.done [#allocation3], 1024
    $region13: #{tpu_custom_call.1} parent=1 // pred_fallthru
      _
    // Predicated region
    $region14: #{tpu_custom_call.1} parent=1 // pred_check
      _
    $region15: #{tpu_custom_call.1} parent=1 // pred_check_branch
      %38 = sbr.rel (0) target = $region17
    $region16: #{tpu_custom_call.1} parent=1 // pred_region
      %39 = dma.done [#allocation6], 1024
    $region17: #{tpu_custom_call.1} parent=1 // pred_fallthru
      _
    %v40 = vld [vmem:[#allocation2] sm:$0xff]
    %v41 = vld [vmem:[#allocation2 + $0x8] sm:$0xff]
    %s42 = scalar_lea.vmem [#allocation2], 16
    %v43 = vld [vmem:[%s42] sm:$0xff]
    %v44 = vld [vmem:[%s42 + $0x8] sm:$0xff]
    %s45 = scalar_lea.vmem [#allocation2], 32
    %v46 = vld [vmem:[%s45] sm:$0xff]
    %v47 = vld [vmem:[%s45 + $0x8] sm:$0xff]
    %s48 = scalar_lea.vmem [#allocation2], 48
    %v49 = vld [vmem:[%s48] sm:$0xff]
    %v50 = vld [vmem:[%s48 + $0x8] sm:$0xff]
    %v51 = vld [vmem:[#allocation5] sm:$0xff]
    %v52 = vld [vmem:[#allocation5 + $0x8] sm:$0xff]
    %s53 = scalar_lea.vmem [#allocation5], 16
    %v54 = vld [vmem:[%s53] sm:$0xff]
    %v55 = vld [vmem:[%s53 + $0x8] sm:$0xff]
    %s56 = scalar_lea.vmem [#allocation5], 32
    %v57 = vld [vmem:[%s56] sm:$0xff]
    %v58 = vld [vmem:[%s56 + $0x8] sm:$0xff]
    %s59 = scalar_lea.vmem [#allocation5], 48
    %v60 = vld [vmem:[%s59] sm:$0xff]
    %v61 = vld [vmem:[%s59 + $0x8] sm:$0xff]
    %v62 = vmin.f32 %v46, %v57
    %v63 = vmin.f32 %v47, %v58
    %v64 = vmax.f32 %v40, %v51
    %v65 = vmax.f32 %v41, %v52
    %v66 = vsub.f32 %v62, %v64
    %v67 = vsub.f32 %v63, %v65
    %v68 = vmax.f32 %v66, 0.0
    %v69 = vmax.f32 %v67, 0.0
    %v70 = vmin.f32 %v49, %v60
    %v71 = vmin.f32 %v50, %v61
    %v72 = vmax.f32 %v43, %v54
    %v73 = vmax.f32 %v44, %v55
    %v74 = vsub.f32 %v70, %v72
    %v75 = vsub.f32 %v71, %v73
    %v76 = vmax.f32 %v74, 0.0
    %v77 = vmax.f32 %v75, 0.0
    %v78 = vmul.f32 %v68, %v76
    %v79 = vmul.f32 %v69, %v77
    %v80 = vsub.f32 %v46, %v40
    %v81 = vsub.f32 %v47, %v41
    %v82 = vsub.f32 %v49, %v43
    %v83 = vsub.f32 %v50, %v44
    %v84 = vmul.f32 %v80, %v82
    %v85 = vmul.f32 %v81, %v83
    %v86 = vsub.f32 %v57, %v51
    %v87 = vsub.f32 %v58, %v52
    %v88 = vsub.f32 %v60, %v54
    %v89 = vsub.f32 %v61, %v55
    %v90 = vmul.f32 %v86, %v88
    %v91 = vmul.f32 %v87, %v89
    %v92 = vadd.f32 %v84, %v90
    %v93 = vadd.f32 %v85, %v91
    %v94 = vsub.f32 %v92, %v78
    %v95 = vsub.f32 %v93, %v79
    %v96 = vadd.f32 %v94, 1e-06
    %v97 = vadd.f32 %v95, 1e-06
    %v98 = vmax.f32 %v46, %v57
    %v99 = vmax.f32 %v47, %v58
    %v100 = vmin.f32 %v40, %v51
    %v101 = vmin.f32 %v41, %v52
    %v102 = vsub.f32 %v98, %v100
    %v103 = vsub.f32 %v99, %v101
    %v104 = vmax.f32 %v102, 0.0
    %v105 = vmax.f32 %v103, 0.0
    %v106 = vmax.f32 %v49, %v60
    %v107 = vmax.f32 %v50, %v61
    %v108 = vmin.f32 %v43, %v54
    %v109 = vmin.f32 %v44, %v55
    %v110 = vsub.f32 %v106, %v108
    %v111 = vsub.f32 %v107, %v109
    %v112 = vmax.f32 %v110, 0.0
    %v113 = vmax.f32 %v111, 0.0
    %v114 = vmul.f32 %v104, %v104
    %v115 = vmul.f32 %v105, %v105
    %v116 = vmul.f32 %v112, %v112
    %v117 = vmul.f32 %v113, %v113
    %v118 = vadd.f32 %v114, %v116
    %v119 = vadd.f32 %v115, %v117
    %v120 = vadd.f32 %v118, 1e-06
    %v121 = vadd.f32 %v119, 1e-06
    %v122 = vadd.f32 %v51, %v57
    %v123 = vadd.f32 %v52, %v58
    %v124 = vadd.f32 %v40, %v46
    %v125 = vadd.f32 %v41, %v47
    %v126 = vsub.f32 %v122, %v124
    %v127 = vsub.f32 %v123, %v125
    %v128 = vmul.f32 %v126, %v126
    %v129 = vmul.f32 %v127, %v127
    %v130 = vmul.f32 %v128, 0.25
    %v131 = vmul.f32 %v129, 0.25
    %v132 = vadd.f32 %v54, %v60
    %v133 = vadd.f32 %v55, %v61
    %v134 = vadd.f32 %v43, %v49
    %v135 = vadd.f32 %v44, %v50
    %v136 = vsub.f32 %v132, %v134
    %v137 = vsub.f32 %v133, %v135
    %v138 = vmul.f32 %v136, %v136
    %v139 = vmul.f32 %v137, %v137
    %v140 = vmul.f32 %v138, 0.25
    %v141 = vmul.f32 %v139, 0.25
    %v142 = vadd.f32 %v130, %v140
    %v143 = vadd.f32 %v131, %v141
    %v144 = vrcp.pop %v96
    %v145 = vmul.f32 1.0, %v144
    %v146 = vrcp.pop %v97
    %v147 = vmul.f32 1.0, %v146
    %v148 = vrcp.pop %v120
    %v149 = vmul.f32 1.0, %v148
    %v150 = vrcp.pop %v121
    %v151 = vmul.f32 1.0, %v150
    %v152 = vmul.f32 %v78, %v145
    %v153 = vmul.f32 %v79, %v147
    %v154 = vsub.f32 1.0, %v152
    %v155 = vsub.f32 1.0, %v153
    %v156 = vmul.f32 %v142, %v149
    %v157 = vmul.f32 %v143, %v151
    %v158 = vadd.f32 %v154, %v156
    %v159 = vadd.f32 %v155, %v157
    %p160 = scmp.ne.s32.totalorder 0, 0
    // Predicated region
    $region18: #{tpu_custom_call.1} parent=1 // pred_check
      %p161 = pneg %p160
    $region19: #{tpu_custom_call.1} parent=1 // pred_check_branch
      %163 = sbr.rel (%p161) target = $region21
    $region20: #{tpu_custom_call.1} parent=1 // pred_region
      %v164 = vadd.f32 %v158, %v159
      %v165 = vrot.slane %v164, 4
      %v166 = vadd.f32 %v164, %v165
      %v167 = vrot.slane %v166, 2
      %v168 = vadd.f32 %v166, %v167
      %v169 = vrot.slane %v168, 1
      %v170 = vadd.f32 %v168, %v169
      %171 = vst [vmem:[#allocation7] sm:$0x1] %v170
    $region21: #{tpu_custom_call.1} parent=1 // pred_fallthru
      _
    %p172 = scmp.eq.s32.totalorder 0, 0
    // Predicated region
    $region22: #{tpu_custom_call.1} parent=1 // pred_check
      %p173 = pneg %p172
    $region23: #{tpu_custom_call.1} parent=1 // pred_check_branch
      %175 = sbr.rel (%p173) target = $region25
    $region24: #{tpu_custom_call.1} parent=1 // pred_region
      %v176 = vlaneseq
      %v177 = vshrl.u32 %v176, 7
      %v178 = vadd.s32 %v177, 8
      %v179 = vlaneseq
      %v180 = vand.u32 %v179, 127
      %v181 = vmul.u32 %v177, 128
      %v182 = vmul.u32 %v178, 128
      %v183 = vadd.s32 %v181, %v180
      %v184 = vadd.s32 %v182, %v180
      %vm185 = vcmp.lt.s32.totalorder %v183, 8
      %vm186 = vcmp.lt.s32.totalorder %v184, 8
      %v187 = vsel %vm185, %v158, 0.0
      %v188 = vsel %vm186, %v159, 0.0
      %v189 = vadd.f32 %v187, %v188
      %v190 = vrot.slane %v189, 4
      %v191 = vadd.f32 %v189, %v190
      %v192 = vrot.slane %v191, 2
      %v193 = vadd.f32 %v191, %v192
      %v194 = vrot.slane %v193, 1
      %v195 = vadd.f32 %v193, %v194
      %196 = vst [vmem:[#allocation7] sm:$0x1] %v195
    $region25: #{tpu_custom_call.1} parent=1 // pred_fallthru
      _
    // Predicated region
    $region26: #{tpu_custom_call.1} parent=1 // pred_check
      _
    $region27: #{tpu_custom_call.1} parent=1 // pred_check_branch
      %198 = sbr.rel (0) target = $region29
    $region28: #{tpu_custom_call.1} parent=1 // pred_region
      %s200 = ssub.s32 16, 16
      %201 = vsyncadd [#allocation4], %s200
      %s203 = sshll.u32 [#allocation7], 4
      %s204 = int_to_ptr.vmem [resolvable:$true] %s203
      %206 = dma.vmem_to_hbm [thread:$0]  %s204, 16, %s2, [#allocation4]
    $region29: #{tpu_custom_call.1} parent=1 // pred_fallthru
      _
    // Predicated region
    $region30: #{tpu_custom_call.1} parent=1 // pred_check
      _
    $region31: #{tpu_custom_call.1} parent=1 // pred_check_branch
      %208 = sbr.rel (0) target = $region33
    $region32: #{tpu_custom_call.1} parent=1 // pred_region
      %209 = dma.done [#allocation4], 16
    $region33: #{tpu_custom_call.1} parent=1 // pred_fallthru
      _
    %210 = vsyncpa [#allocation3], 1
    %211 = vsyncpa [#allocation6], 1
    %212 = vsyncpa [#allocation4], 1

</llo_original>
